<compile_context>
chip_gen: v7x
topology: tpu7x:2x2x1
jax: 0.10.0
libtpu: 0.0.40
codegen_flags: <defaults>
</compile_context>

<pallas_src>
import functools

import jax
import jax.numpy as jnp
from jax.experimental import pallas as pl
from jax.experimental.pallas import tpu as pltpu


def _prompt_concat_kernel(n_ctx, shared_suffix, *refs):
    """Assemble a tile of `tc` classes' prompt rows in one grid step.

    Shapes seen by the kernel (one grid step == `tc` classes):
      prefix_ref   : (tc, 1,        D)
      ctx_*_ref    : (1,  n_ctx,    D)   (generic context, shared over classes)
      suffix_*_ref : (tc, S_suffix, D)
      out_*_ref    : (tc, S_total,  D)   with S_total = 1 + n_ctx + S_suffix
    """
    if shared_suffix:
        (prefix_ref, ctx_ref, ctx_pos_ref, ctx_neg_ref,
         suffix_ref, out_ref, out_pos_ref, out_neg_ref) = refs
        suffix_neg_ref = suffix_ref
    else:
        (prefix_ref, ctx_ref, ctx_pos_ref, ctx_neg_ref,
         suffix_ref, suffix_neg_ref, out_ref, out_pos_ref, out_neg_ref) = refs

    tc, _, d = out_ref.shape

    pre = prefix_ref[...]                         # (tc, 1, D)
    suf = suffix_ref[...]                         # (tc, S_suffix, D)
    suf_neg = suf if shared_suffix else suffix_neg_ref[...]

    # ctx blocks are already (1, n_ctx, D): broadcast along the class dim only
    # (no [None, :, :] reshape inside the kernel).
    ctx_b = jnp.broadcast_to(ctx_ref[...], (tc, n_ctx, d))
    ctx_pos_b = jnp.broadcast_to(ctx_pos_ref[...], (tc, n_ctx, d))
    ctx_neg_b = jnp.broadcast_to(ctx_neg_ref[...], (tc, n_ctx, d))

    # prompts = [prefix | ctx | suffix]
    out_ref[:, 0:1, :] = pre
    out_ref[:, 1:1 + n_ctx, :] = ctx_b
    out_ref[:, 1 + n_ctx:, :] = suf

    # prompts_pos = [prefix | ctx_pos | suffix]
    out_pos_ref[:, 0:1, :] = pre
    out_pos_ref[:, 1:1 + n_ctx, :] = ctx_pos_b
    out_pos_ref[:, 1 + n_ctx:, :] = suf

    # prompts_neg = [prefix | ctx_neg | suffix or suffix_nocls]
    out_neg_ref[:, 0:1, :] = pre
    out_neg_ref[:, 1:1 + n_ctx, :] = ctx_neg_b
    out_neg_ref[:, 1 + n_ctx:, :] = suf_neg


def _vmem_limit_bytes():
    """Per-generation VMEM budget: ~3/4 of physical per-core VMEM, capped."""
    try:
        cap = int(pltpu.get_tpu_info().vmem_capacity_bytes)
    except Exception:
        cap = 64 << 20  # conservative (v7x per-TC) fallback
    return int(min(0.75 * cap, 96 << 20))


def _choose_class_tile(n_cls, n_ctx, s_suffix, s_total, d, itemsize,
                       vmem_limit, shared_suffix):
    """Largest class tile whose double-buffered working set fits the budget."""
    per_cls = (1 + (1 if shared_suffix else 2) * s_suffix + 3 * s_total) * d * itemsize
    fixed = 3 * n_ctx * d * itemsize            # class-invariant ctx blocks
    budget = int(0.8 * vmem_limit)              # headroom for compiler scratch
    avail = max(budget - 2 * fixed, 2 * per_cls)
    tc = max(1, avail // (2 * per_cls))         # 2x == double buffering
    return int(min(tc, n_cls, 1024))


def prompt_learner_forward(params, neg_prompt_wcls=True, class_tile=None):
    """JAX/Pallas equivalent of PromptLearner.forward
    (class_token_position='end', generic 2-D context vectors)."""
    prefix = params["token_prefix"]          # (n_cls, 1, D)
    suffix = params["token_suffix"]          # (n_cls, S_suffix, D)
    suffix_nocls = params["token_suffix_nocls"]
    ctx = params["ctx"]                      # (n_ctx, D)
    ctx_pos = params["ctx_pos"]
    ctx_neg = params["ctx_neg"]

    n_cls, _, d = prefix.shape
    n_ctx = ctx.shape[0]
    s_suffix = suffix.shape[1]
    s_total = 1 + n_ctx + s_suffix
    dtype = prefix.dtype
    itemsize = jnp.dtype(dtype).itemsize

    shared_suffix = bool(neg_prompt_wcls)
    vmem_limit = _vmem_limit_bytes()

    if class_tile is None:
        class_tile = _choose_class_tile(n_cls, n_ctx, s_suffix, s_total, d,
                                        itemsize, vmem_limit, shared_suffix)
    tc = int(min(class_tile, n_cls))
    grid = (pl.cdiv(n_cls, tc),)

    # Present ctx as (1, n_ctx, D) so the kernel only broadcasts the class dim.
    ctx3 = ctx[None]
    ctx_pos3 = ctx_pos[None]
    ctx_neg3 = ctx_neg[None]

    kernel = functools.partial(_prompt_concat_kernel, n_ctx, shared_suffix)

    out_shape = (
        jax.ShapeDtypeStruct((n_cls, s_total, d), dtype),
        jax.ShapeDtypeStruct((n_cls, s_total, d), dtype),
        jax.ShapeDtypeStruct((n_cls, s_total, d), dtype),
    )

    per_cls_specs = [
        pl.BlockSpec((tc, 1, d), lambda i: (i, 0, 0)),            # prefix
        pl.BlockSpec((1, n_ctx, d), lambda i: (0, 0, 0)),         # ctx
        pl.BlockSpec((1, n_ctx, d), lambda i: (0, 0, 0)),         # ctx_pos
        pl.BlockSpec((1, n_ctx, d), lambda i: (0, 0, 0)),         # ctx_neg
        pl.BlockSpec((tc, s_suffix, d), lambda i: (i, 0, 0)),     # suffix
    ]
    inputs = (prefix, ctx3, ctx_pos3, ctx_neg3, suffix)
    if not shared_suffix:
        per_cls_specs.append(
            pl.BlockSpec((tc, s_suffix, d), lambda i: (i, 0, 0)))  # suffix_nocls
        inputs = inputs + (suffix_nocls,)

    grid_spec = pltpu.PrefetchScalarGridSpec(
        num_scalar_prefetch=0,
        grid=grid,
        in_specs=per_cls_specs,
        out_specs=[
            pl.BlockSpec((tc, s_total, d), lambda i: (i, 0, 0)),
            pl.BlockSpec((tc, s_total, d), lambda i: (i, 0, 0)),
            pl.BlockSpec((tc, s_total, d), lambda i: (i, 0, 0)),
        ],
    )

    prompts, prompts_pos, prompts_neg = pl.pallas_call(
        kernel,
        out_shape=out_shape,
        grid_spec=grid_spec,
        compiler_params=pltpu.CompilerParams(
            dimension_semantics=("parallel",),
            vmem_limit_bytes=vmem_limit),
    )(*inputs)

    return (prompts, prompts_pos, prompts_neg,
            params["temperature"], params["spatial_T"])


def init_params(key, n_cls, n_ctx, ctx_dim, seq_len, dtype=jnp.float32):
    """Deterministic synthetic parameter init mirroring PromptLearner.__init__
    (generic context, std=0.02 normal; prefix/suffix stand in for the frozen
    CLIP token embeddings)."""
    k_ctx, k_pos, k_neg, k_emb, k_emb_nocls = jax.random.split(key, 5)
    s_suffix = seq_len - 1 - n_ctx
    embedding = jax.random.normal(k_emb, (n_cls, seq_len, ctx_dim), dtype) * 0.02
    embedding_nocls = jax.random.normal(
        k_emb_nocls, (n_cls, seq_len, ctx_dim), dtype) * 0.02
    return {
        "ctx": jax.random.normal(k_ctx, (n_ctx, ctx_dim), dtype) * 0.02,
        "ctx_pos": jax.random.normal(k_pos, (n_ctx, ctx_dim), dtype) * 0.02,
        "ctx_neg": jax.random.normal(k_neg, (n_ctx, ctx_dim), dtype) * 0.02,
        "token_prefix": embedding[:, :1, :],                     # SOS embedding
        "token_suffix": embedding[:, 1 + n_ctx:, :],             # class + EOS etc.
        "token_suffix_nocls": embedding_nocls[:, 1 + n_ctx:, :],
        "temperature": jnp.asarray(3.91, dtype),
        "spatial_T": jnp.asarray(3.0, dtype),
    }, s_suffix


def _reference_forward(params, neg_prompt_wcls=True):
    prefix = params["token_prefix"]
    suffix = params["token_suffix"]
    suffix_nocls = params["token_suffix_nocls"]
    n_cls = prefix.shape[0]
    ctx = jnp.broadcast_to(params["ctx"][None], (n_cls,) + params["ctx"].shape)
    ctx_pos = jnp.broadcast_to(params["ctx_pos"][None],
                               (n_cls,) + params["ctx_pos"].shape)
    ctx_neg = jnp.broadcast_to(params["ctx_neg"][None],
                               (n_cls,) + params["ctx_neg"].shape)
    prompts = jnp.concatenate([prefix, ctx, suffix], axis=1)
    prompts_pos = jnp.concatenate([prefix, ctx_pos, suffix], axis=1)
    suf_neg = suffix if neg_prompt_wcls else suffix_nocls
    prompts_neg = jnp.concatenate([prefix, ctx_neg, suf_neg], axis=1)
    return prompts, prompts_pos, prompts_neg


if __name__ == "__main__":
    # Small shapes: n_cls=16 classes, n_ctx=8 context tokens, ctx_dim=128
    # (lane-dense last dim), tokenized sequence length 16 -> suffix has
    # 16 - 1 - 8 = 7 tokens.
    n_cls, n_ctx, ctx_dim, seq_len = 16, 8, 128, 16

    key = jax.random.PRNGKey(0)
    params, _ = init_params(key, n_cls, n_ctx, ctx_dim, seq_len)

    # Auto-sized class tile (will clamp to n_cls here -> single grid step).
    outs = prompt_learner_forward(params, neg_prompt_wcls=True)
    outs = jax.block_until_ready(outs)
    prompts, prompts_pos, prompts_neg, temperature, spatial_T = outs

    # Cross-check against a plain-JAX reference of the same forward.
    ref_p, ref_pp, ref_pn = _reference_forward(params, neg_prompt_wcls=True)
    assert prompts.shape == (n_cls, seq_len, ctx_dim)
    assert jnp.allclose(prompts, ref_p)
    assert jnp.allclose(prompts_pos, ref_pp)
    assert jnp.allclose(prompts_neg, ref_pn)
    assert abs(float(temperature) - 3.91) < 1e-5
    assert abs(float(spatial_T) - 3.0) < 1e-5

    # Exercise explicit multi-step class tiling (16 classes / tile of 8 -> 2 steps).
    outs_tiled = jax.block_until_ready(
        prompt_learner_forward(params, neg_prompt_wcls=True, class_tile=8))
    assert jnp.allclose(outs_tiled[0], ref_p)
    assert jnp.allclose(outs_tiled[1], ref_pp)
    assert jnp.allclose(outs_tiled[2], ref_pn)

    # Also exercise the neg_prompt_wcls=False branch (suffix_nocls input).
    outs2 = jax.block_until_ready(
        prompt_learner_forward(params, neg_prompt_wcls=False, class_tile=8))
    _, _, prompts_neg2, _, _ = outs2
    _, _, ref_pn2 = _reference_forward(params, neg_prompt_wcls=False)
    assert jnp.allclose(prompts_neg2, ref_pn2)

    print("KERNEL_OK")
</pallas_src>

<mosaic_0001>
module attributes {stable_mosaic.version = 11 : i64} {
  func.func @_prompt_concat_kernel(%arg0: i32, %arg1: memref<16x1x128xf32, #tpu.memory_space<vmem>>, %arg2: memref<1x8x128xf32, #tpu.memory_space<vmem>>, %arg3: memref<1x8x128xf32, #tpu.memory_space<vmem>>, %arg4: memref<1x8x128xf32, #tpu.memory_space<vmem>>, %arg5: memref<16x7x128xf32, #tpu.memory_space<vmem>>, %arg6: memref<16x16x128xf32, #tpu.memory_space<vmem>>, %arg7: memref<16x16x128xf32, #tpu.memory_space<vmem>>, %arg8: memref<16x16x128xf32, #tpu.memory_space<vmem>>) attributes {dimension_semantics = [#tpu.dimension_semantics<parallel>], iteration_bounds = array<i64: 1>, scalar_prefetch = 0 : i64, scratch_operands = 0 : i64, tpu.core_type = #tpu.core_type<tc>, window_params = [{transform_indices = @transform_0, window_bounds = array<i64: 16, 1, 128>}, {pipeline_mode = #tpu.pipeline_mode<synchronous>, transform_indices = @transform_1, window_bounds = array<i64: 1, 8, 128>}, {pipeline_mode = #tpu.pipeline_mode<synchronous>, transform_indices = @transform_2, window_bounds = array<i64: 1, 8, 128>}, {pipeline_mode = #tpu.pipeline_mode<synchronous>, transform_indices = @transform_3, window_bounds = array<i64: 1, 8, 128>}, {transform_indices = @transform_4, window_bounds = array<i64: 16, 7, 128>}, {transform_indices = @transform_5, window_bounds = array<i64: 16, 16, 128>}, {transform_indices = @transform_6, window_bounds = array<i64: 16, 16, 128>}, {transform_indices = @transform_7, window_bounds = array<i64: 16, 16, 128>}]} {
    %c0 = arith.constant 0 : index
    %c0_0 = arith.constant 0 : index
    %c0_1 = arith.constant 0 : index
    %0 = vector.load %arg1[%c0, %c0_0, %c0_1] : memref<16x1x128xf32, #tpu.memory_space<vmem>>, vector<16x1x128xf32>
    %c0_2 = arith.constant 0 : index
    %c0_3 = arith.constant 0 : index
    %c0_4 = arith.constant 0 : index
    %1 = vector.load %arg5[%c0_2, %c0_3, %c0_4] : memref<16x7x128xf32, #tpu.memory_space<vmem>>, vector<16x7x128xf32>
    %c0_5 = arith.constant 0 : index
    %c0_6 = arith.constant 0 : index
    %c0_7 = arith.constant 0 : index
    %2 = vector.load %arg2[%c0_5, %c0_6, %c0_7] : memref<1x8x128xf32, #tpu.memory_space<vmem>>, vector<1x8x128xf32>
    %3 = vector.shape_cast %2 : vector<1x8x128xf32> to vector<1x8x128xf32>
    %4 = vector.broadcast %3 : vector<1x8x128xf32> to vector<16x8x128xf32>
    %c0_8 = arith.constant 0 : index
    %c0_9 = arith.constant 0 : index
    %c0_10 = arith.constant 0 : index
    %5 = vector.load %arg3[%c0_8, %c0_9, %c0_10] : memref<1x8x128xf32, #tpu.memory_space<vmem>>, vector<1x8x128xf32>
    %6 = vector.shape_cast %5 : vector<1x8x128xf32> to vector<1x8x128xf32>
    %7 = vector.broadcast %6 : vector<1x8x128xf32> to vector<16x8x128xf32>
    %c0_11 = arith.constant 0 : index
    %c0_12 = arith.constant 0 : index
    %c0_13 = arith.constant 0 : index
    %8 = vector.load %arg4[%c0_11, %c0_12, %c0_13] : memref<1x8x128xf32, #tpu.memory_space<vmem>>, vector<1x8x128xf32>
    %9 = vector.shape_cast %8 : vector<1x8x128xf32> to vector<1x8x128xf32>
    %10 = vector.broadcast %9 : vector<1x8x128xf32> to vector<16x8x128xf32>
    %c0_14 = arith.constant 0 : index
    %c0_15 = arith.constant 0 : index
    %c0_16 = arith.constant 0 : index
    %11 = vector.load %arg6[%c0_14, %c0_15, %c0_16] : memref<16x16x128xf32, #tpu.memory_space<vmem>>, vector<16x1x128xf32>
    tpu.vector_store %arg6[%c0_14, %c0_15, %c0_16], %0 {strides = array<i32>} : memref<16x16x128xf32, #tpu.memory_space<vmem>>, vector<16x1x128xf32>,
    %c0_17 = arith.constant 0 : index
    %c1 = arith.constant 1 : index
    %c0_18 = arith.constant 0 : index
    %12 = vector.load %arg6[%c0_17, %c1, %c0_18] : memref<16x16x128xf32, #tpu.memory_space<vmem>>, vector<16x8x128xf32>
    tpu.vector_store %arg6[%c0_17, %c1, %c0_18], %4 {strides = array<i32>} : memref<16x16x128xf32, #tpu.memory_space<vmem>>, vector<16x8x128xf32>,
    %c0_19 = arith.constant 0 : index
    %c9 = arith.constant 9 : index
    %c0_20 = arith.constant 0 : index
    %13 = vector.load %arg6[%c0_19, %c9, %c0_20] : memref<16x16x128xf32, #tpu.memory_space<vmem>>, vector<16x7x128xf32>
    tpu.vector_store %arg6[%c0_19, %c9, %c0_20], %1 {strides = array<i32>} : memref<16x16x128xf32, #tpu.memory_space<vmem>>, vector<16x7x128xf32>,
    %c0_21 = arith.constant 0 : index
    %c0_22 = arith.constant 0 : index
    %c0_23 = arith.constant 0 : index
    %14 = vector.load %arg7[%c0_21, %c0_22, %c0_23] : memref<16x16x128xf32, #tpu.memory_space<vmem>>, vector<16x1x128xf32>
    tpu.vector_store %arg7[%c0_21, %c0_22, %c0_23], %0 {strides = array<i32>} : memref<16x16x128xf32, #tpu.memory_space<vmem>>, vector<16x1x128xf32>,
    %c0_24 = arith.constant 0 : index
    %c1_25 = arith.constant 1 : index
    %c0_26 = arith.constant 0 : index
    %15 = vector.load %arg7[%c0_24, %c1_25, %c0_26] : memref<16x16x128xf32, #tpu.memory_space<vmem>>, vector<16x8x128xf32>
    tpu.vector_store %arg7[%c0_24, %c1_25, %c0_26], %7 {strides = array<i32>} : memref<16x16x128xf32, #tpu.memory_space<vmem>>, vector<16x8x128xf32>,
    %c0_27 = arith.constant 0 : index
    %c9_28 = arith.constant 9 : index
    %c0_29 = arith.constant 0 : index
    %16 = vector.load %arg7[%c0_27, %c9_28, %c0_29] : memref<16x16x128xf32, #tpu.memory_space<vmem>>, vector<16x7x128xf32>
    tpu.vector_store %arg7[%c0_27, %c9_28, %c0_29], %1 {strides = array<i32>} : memref<16x16x128xf32, #tpu.memory_space<vmem>>, vector<16x7x128xf32>,
    %c0_30 = arith.constant 0 : index
    %c0_31 = arith.constant 0 : index
    %c0_32 = arith.constant 0 : index
    %17 = vector.load %arg8[%c0_30, %c0_31, %c0_32] : memref<16x16x128xf32, #tpu.memory_space<vmem>>, vector<16x1x128xf32>
    tpu.vector_store %arg8[%c0_30, %c0_31, %c0_32], %0 {strides = array<i32>} : memref<16x16x128xf32, #tpu.memory_space<vmem>>, vector<16x1x128xf32>,
    %c0_33 = arith.constant 0 : index
    %c1_34 = arith.constant 1 : index
    %c0_35 = arith.constant 0 : index
    %18 = vector.load %arg8[%c0_33, %c1_34, %c0_35] : memref<16x16x128xf32, #tpu.memory_space<vmem>>, vector<16x8x128xf32>
    tpu.vector_store %arg8[%c0_33, %c1_34, %c0_35], %10 {strides = array<i32>} : memref<16x16x128xf32, #tpu.memory_space<vmem>>, vector<16x8x128xf32>,
    %c0_36 = arith.constant 0 : index
    %c9_37 = arith.constant 9 : index
    %c0_38 = arith.constant 0 : index
    %19 = vector.load %arg8[%c0_36, %c9_37, %c0_38] : memref<16x16x128xf32, #tpu.memory_space<vmem>>, vector<16x7x128xf32>
    tpu.vector_store %arg8[%c0_36, %c9_37, %c0_38], %1 {strides = array<i32>} : memref<16x16x128xf32, #tpu.memory_space<vmem>>, vector<16x7x128xf32>,
    return
  }
  func.func @transform_0(%arg0: i32) -> (i32, i32, i32) {
    %c0_i32 = arith.constant 0 : i32
    %c0_i32_0 = arith.constant 0 : i32
    %c0_i32_1 = arith.constant 0 : i32
    return %arg0, %c0_i32, %c0_i32_0 : i32, i32, i32
  }
  func.func @transform_1(%arg0: i32) -> (i32, i32, i32) {
    %c0_i32 = arith.constant 0 : i32
    %c0_i32_0 = arith.constant 0 : i32
    %c0_i32_1 = arith.constant 0 : i32
    %c0_i32_2 = arith.constant 0 : i32
    return %c0_i32, %c0_i32_0, %c0_i32_1 : i32, i32, i32
  }
  func.func @transform_2(%arg0: i32) -> (i32, i32, i32) {
    %c0_i32 = arith.constant 0 : i32
    %c0_i32_0 = arith.constant 0 : i32
    %c0_i32_1 = arith.constant 0 : i32
    %c0_i32_2 = arith.constant 0 : i32
    return %c0_i32, %c0_i32_0, %c0_i32_1 : i32, i32, i32
  }
  func.func @transform_3(%arg0: i32) -> (i32, i32, i32) {
    %c0_i32 = arith.constant 0 : i32
    %c0_i32_0 = arith.constant 0 : i32
    %c0_i32_1 = arith.constant 0 : i32
    %c0_i32_2 = arith.constant 0 : i32
    return %c0_i32, %c0_i32_0, %c0_i32_1 : i32, i32, i32
  }
  func.func @transform_4(%arg0: i32) -> (i32, i32, i32) {
    %c0_i32 = arith.constant 0 : i32
    %c0_i32_0 = arith.constant 0 : i32
    %c0_i32_1 = arith.constant 0 : i32
    return %arg0, %c0_i32, %c0_i32_0 : i32, i32, i32
  }
  func.func @transform_5(%arg0: i32) -> (i32, i32, i32) {
    %c0_i32 = arith.constant 0 : i32
    %c0_i32_0 = arith.constant 0 : i32
    %c0_i32_1 = arith.constant 0 : i32
    return %arg0, %c0_i32, %c0_i32_0 : i32, i32, i32
  }
  func.func @transform_6(%arg0: i32) -> (i32, i32, i32) {
    %c0_i32 = arith.constant 0 : i32
    %c0_i32_0 = arith.constant 0 : i32
    %c0_i32_1 = arith.constant 0 : i32
    return %arg0, %c0_i32, %c0_i32_0 : i32, i32, i32
  }
  func.func @transform_7(%arg0: i32) -> (i32, i32, i32) {
    %c0_i32 = arith.constant 0 : i32
    %c0_i32_0 = arith.constant 0 : i32
    %c0_i32_1 = arith.constant 0 : i32
    return %arg0, %c0_i32, %c0_i32_0 : i32, i32, i32
  }
}

</mosaic_0001>

<llo_original>
// kernel: tpu_custom_call.1
$region0: #{tpu_custom_call.1}
  #allocation0 [shape = 'u32[]', space=smem, size = 0x4, offset = 0x4, fixed_abs, tag = 'smem constant byte address 0x4 - core index']
  #allocation1 [shape = 'u32[144,128]{1,0:T(1,128)}', space=vmem, size = 0x12000, scoped, tag = 'internal scratch']
  %s0 = inlined_call_operand.vmem [shape: f32[16,1,128], index: 0, kind: input, shape index: {}]
  %s1 = inlined_call_operand.vmem [shape: f32[1,8,128], index: 1, kind: input, shape index: {}]
  %s2 = inlined_call_operand.vmem [shape: f32[1,8,128], index: 2, kind: input, shape index: {}]
  %s3 = inlined_call_operand.vmem [shape: f32[1,8,128], index: 3, kind: input, shape index: {}]
  %s4 = inlined_call_operand.vmem [shape: f32[16,7,128], index: 4, kind: input, shape index: {}]
  %s5 = inlined_call_operand.hbm [shape: f32[16,16,128], index: 5, kind: output, shape index: {0}]
  %s6 = inlined_call_operand.hbm [shape: f32[16,16,128], index: 6, kind: output, shape index: {1}]
  %s7 = inlined_call_operand.hbm [shape: f32[16,16,128], index: 7, kind: output, shape index: {2}]
  %8 = xla_tuple %s5, %s6, %s7
  %s9 = sld [smem:[#allocation0]]
  $region46: #{tpu_custom_call.1} parent=0
    _
  %s11 = ssub.s32 1, %s9
  %s12 = scalar_select 0, %s11, %s9
  $region1: #{tpu_custom_call.1} parent=0
    #allocation2 [shape = 'u8[131072]{0}', space=vmem, size = 0x20000, scoped, tag = 'output window, operand 0, single buffered']
    #allocation3 [shape = 's32[1]{0}', space=sflag, size = 0x4, scoped, tag = 'scoped memory for tpu_custom_call.1']
    #allocation4 [shape = 'u8[131072]{0}', space=vmem, size = 0x20000, scoped, tag = 'output window, operand 1, single buffered']
    #allocation5 [shape = 's32[1]{0}', space=sflag, size = 0x4, scoped, tag = 'scoped memory for tpu_custom_call.1']
    #allocation6 [shape = 'u8[131072]{0}', space=vmem, size = 0x20000, scoped, tag = 'output window, operand 2, single buffered']
    %13 = vsyncpa [#allocation3], 0
    %14 = vsyncpa [#allocation5], 0
    // Predicated region
    $region2: #{tpu_custom_call.1} parent=1 // pred_check
      _
    $region3: #{tpu_custom_call.1} parent=1 // pred_check_branch
      %16 = sbr.rel (0) target = $region5
    $region4: #{tpu_custom_call.1} parent=1 // pred_region
      _
    $region5: #{tpu_custom_call.1} parent=1 // pred_fallthru
      _
    // Predicated region
    $region6: #{tpu_custom_call.1} parent=1 // pred_check
      _
    $region7: #{tpu_custom_call.1} parent=1 // pred_check_branch
      %18 = sbr.rel (0) target = $region9
    $region8: #{tpu_custom_call.1} parent=1 // pred_region
      _
    $region9: #{tpu_custom_call.1} parent=1 // pred_fallthru
      _
    // Predicated region
    $region10: #{tpu_custom_call.1} parent=1 // pred_check
      _
    $region11: #{tpu_custom_call.1} parent=1 // pred_check_branch
      %20 = sbr.rel (0) target = $region13
    $region12: #{tpu_custom_call.1} parent=1 // pred_region
      _
    $region13: #{tpu_custom_call.1} parent=1 // pred_fallthru
      _
    // Predicated region
    $region14: #{tpu_custom_call.1} parent=1 // pred_check
      _
    $region15: #{tpu_custom_call.1} parent=1 // pred_check_branch
      %22 = sbr.rel (0) target = $region17
    $region16: #{tpu_custom_call.1} parent=1 // pred_region
      _
    $region17: #{tpu_custom_call.1} parent=1 // pred_fallthru
      _
    // Predicated region
    $region18: #{tpu_custom_call.1} parent=1 // pred_check
      _
    $region19: #{tpu_custom_call.1} parent=1 // pred_check_branch
      %24 = sbr.rel (0) target = $region21
    $region20: #{tpu_custom_call.1} parent=1 // pred_region
      _
    $region21: #{tpu_custom_call.1} parent=1 // pred_fallthru
      _
    %v25 = vld [vmem:[%s0] sm:$0x1]
    %v26 = vld [vmem:[%s0 + $0x1] sm:$0x1]
    %v27 = vld [vmem:[%s0 + $0x2] sm:$0x1]
    %v28 = vld [vmem:[%s0 + $0x3] sm:$0x1]
    %v29 = vld [vmem:[%s0 + $0x4] sm:$0x1]
    %v30 = vld [vmem:[%s0 + $0x5] sm:$0x1]
    %v31 = vld [vmem:[%s0 + $0x6] sm:$0x1]
    %v32 = vld [vmem:[%s0 + $0x7] sm:$0x1]
    %v33 = vld [vmem:[%s0 + $0x8] sm:$0x1]
    %v34 = vld [vmem:[%s0 + $0x9] sm:$0x1]
    %v35 = vld [vmem:[%s0 + $0xa] sm:$0x1]
    %v36 = vld [vmem:[%s0 + $0xb] sm:$0x1]
    %v37 = vld [vmem:[%s0 + $0xc] sm:$0x1]
    %v38 = vld [vmem:[%s0 + $0xd] sm:$0x1]
    %v39 = vld [vmem:[%s0 + $0xe] sm:$0x1]
    %v40 = vld [vmem:[%s0 + $0xf] sm:$0x1]
    %v41 = vld [vmem:[%s4] sm:$0x7f]
    %v42 = vld [vmem:[%s4 + $0x8] sm:$0x7f]
    %v43 = vld [vmem:[%s4 + $0x10] sm:$0x7f]
    %v44 = vld [vmem:[%s4 + $0x18] sm:$0x7f]
    %v45 = vld [vmem:[%s4 + $0x20] sm:$0x7f]
    %v46 = vld [vmem:[%s4 + $0x28] sm:$0x7f]
    %v47 = vld [vmem:[%s4 + $0x30] sm:$0x7f]
    %v48 = vld [vmem:[%s4 + $0x38] sm:$0x7f]
    %v49 = vld [vmem:[%s4 + $0x40] sm:$0x7f]
    %v50 = vld [vmem:[%s4 + $0x48] sm:$0x7f]
    %v51 = vld [vmem:[%s4 + $0x50] sm:$0x7f]
    %v52 = vld [vmem:[%s4 + $0x58] sm:$0x7f]
    %v53 = vld [vmem:[%s4 + $0x60] sm:$0x7f]
    %v54 = vld [vmem:[%s4 + $0x68] sm:$0x7f]
    %v55 = vld [vmem:[%s4 + $0x70] sm:$0x7f]
    %v56 = vld [vmem:[%s4 + $0x78] sm:$0x7f]
    %v57 = vld [vmem:[%s1] sm:$0xff]
    %v58 = vld [vmem:[%s2] sm:$0xff]
    %v59 = vld [vmem:[%s3] sm:$0xff]
    %60 = vst [vmem:[#allocation2] sm:$0x1] %v25
    %61 = vst [vmem:[#allocation2 + $0x10] sm:$0x1] %v26
    %62 = vst [vmem:[#allocation2 + $0x20] sm:$0x1] %v27
    %63 = vst [vmem:[#allocation2 + $0x30] sm:$0x1] %v28
    %64 = vst [vmem:[#allocation2 + $0x40] sm:$0x1] %v29
    %65 = vst [vmem:[#allocation2 + $0x50] sm:$0x1] %v30
    %66 = vst [vmem:[#allocation2 + $0x60] sm:$0x1] %v31
    %67 = vst [vmem:[#allocation2 + $0x70] sm:$0x1] %v32
    %68 = vst [vmem:[#allocation2 + $0x80] sm:$0x1] %v33
    %69 = vst [vmem:[#allocation2 + $0x90] sm:$0x1] %v34
    %70 = vst [vmem:[#allocation2 + $0xa0] sm:$0x1] %v35
    %71 = vst [vmem:[#allocation2 + $0xb0] sm:$0x1] %v36
    %72 = vst [vmem:[#allocation2 + $0xc0] sm:$0x1] %v37
    %73 = vst [vmem:[#allocation2 + $0xd0] sm:$0x1] %v38
    %74 = vst [vmem:[#allocation2 + $0xe0] sm:$0x1] %v39
    %75 = vst [vmem:[#allocation2 + $0xf0] sm:$0x1] %v40
    %76 = vst [vmem:[#allocation2 + $0x1] sm:$0xff] %v57
    %77 = vst [vmem:[#allocation2 + $0x11] sm:$0xff] %v57
    %78 = vst [vmem:[#allocation2 + $0x21] sm:$0xff] %v57
    %79 = vst [vmem:[#allocation2 + $0x31] sm:$0xff] %v57
    %80 = vst [vmem:[#allocation2 + $0x41] sm:$0xff] %v57
    %81 = vst [vmem:[#allocation2 + $0x51] sm:$0xff] %v57
    %82 = vst [vmem:[#allocation2 + $0x61] sm:$0xff] %v57
    %83 = vst [vmem:[#allocation2 + $0x71] sm:$0xff] %v57
    %84 = vst [vmem:[#allocation2 + $0x81] sm:$0xff] %v57
    %85 = vst [vmem:[#allocation2 + $0x91] sm:$0xff] %v57
    %86 = vst [vmem:[#allocation2 + $0xa1] sm:$0xff] %v57
    %87 = vst [vmem:[#allocation2 + $0xb1] sm:$0xff] %v57
    %88 = vst [vmem:[#allocation2 + $0xc1] sm:$0xff] %v57
    %89 = vst [vmem:[#allocation2 + $0xd1] sm:$0xff] %v57
    %90 = vst [vmem:[#allocation2 + $0xe1] sm:$0xff] %v57
    %91 = vst [vmem:[#allocation2 + $0xf1] sm:$0xff] %v57
    %92 = vst [vmem:[#allocation2 + $0x9] sm:$0x7f] %v41
    %93 = vst [vmem:[#allocation2 + $0x19] sm:$0x7f] %v42
    %94 = vst [vmem:[#allocation2 + $0x29] sm:$0x7f] %v43
    %95 = vst [vmem:[#allocation2 + $0x39] sm:$0x7f] %v44
    %96 = vst [vmem:[#allocation2 + $0x49] sm:$0x7f] %v45
    %97 = vst [vmem:[#allocation2 + $0x59] sm:$0x7f] %v46
    %98 = vst [vmem:[#allocation2 + $0x69] sm:$0x7f] %v47
    %99 = vst [vmem:[#allocation2 + $0x79] sm:$0x7f] %v48
    %100 = vst [vmem:[#allocation2 + $0x89] sm:$0x7f] %v49
    %101 = vst [vmem:[#allocation2 + $0x99] sm:$0x7f] %v50
    %102 = vst [vmem:[#allocation2 + $0xa9] sm:$0x7f] %v51
    %103 = vst [vmem:[#allocation2 + $0xb9] sm:$0x7f] %v52
    %104 = vst [vmem:[#allocation2 + $0xc9] sm:$0x7f] %v53
    %105 = vst [vmem:[#allocation2 + $0xd9] sm:$0x7f] %v54
    %106 = vst [vmem:[#allocation2 + $0xe9] sm:$0x7f] %v55
    %107 = vst [vmem:[#allocation2 + $0xf9] sm:$0x7f] %v56
    %108 = vst [vmem:[#allocation4] sm:$0x1] %v25
    %109 = vst [vmem:[#allocation4 + $0x10] sm:$0x1] %v26
    %110 = vst [vmem:[#allocation4 + $0x20] sm:$0x1] %v27
    %111 = vst [vmem:[#allocation4 + $0x30] sm:$0x1] %v28
    %112 = vst [vmem:[#allocation4 + $0x40] sm:$0x1] %v29
    %113 = vst [vmem:[#allocation4 + $0x50] sm:$0x1] %v30
    %114 = vst [vmem:[#allocation4 + $0x60] sm:$0x1] %v31
    %115 = vst [vmem:[#allocation4 + $0x70] sm:$0x1] %v32
    %116 = vst [vmem:[#allocation4 + $0x80] sm:$0x1] %v33
    %117 = vst [vmem:[#allocation4 + $0x90] sm:$0x1] %v34
    %118 = vst [vmem:[#allocation4 + $0xa0] sm:$0x1] %v35
    %119 = vst [vmem:[#allocation4 + $0xb0] sm:$0x1] %v36
    %120 = vst [vmem:[#allocation4 + $0xc0] sm:$0x1] %v37
    %121 = vst [vmem:[#allocation4 + $0xd0] sm:$0x1] %v38
    %122 = vst [vmem:[#allocation4 + $0xe0] sm:$0x1] %v39
    %123 = vst [vmem:[#allocation4 + $0xf0] sm:$0x1] %v40
    %124 = vst [vmem:[#allocation4 + $0x1] sm:$0xff] %v58
    %125 = vst [vmem:[#allocation4 + $0x11] sm:$0xff] %v58
    %126 = vst [vmem:[#allocation4 + $0x21] sm:$0xff] %v58
    %127 = vst [vmem:[#allocation4 + $0x31] sm:$0xff] %v58
    %128 = vst [vmem:[#allocation4 + $0x41] sm:$0xff] %v58
    %129 = vst [vmem:[#allocation4 + $0x51] sm:$0xff] %v58
    %130 = vst [vmem:[#allocation4 + $0x61] sm:$0xff] %v58
    %131 = vst [vmem:[#allocation4 + $0x71] sm:$0xff] %v58
    %132 = vst [vmem:[#allocation4 + $0x81] sm:$0xff] %v58
    %133 = vst [vmem:[#allocation4 + $0x91] sm:$0xff] %v58
    %134 = vst [vmem:[#allocation4 + $0xa1] sm:$0xff] %v58
    %135 = vst [vmem:[#allocation4 + $0xb1] sm:$0xff] %v58
    %136 = vst [vmem:[#allocation4 + $0xc1] sm:$0xff] %v58
    %137 = vst [vmem:[#allocation4 + $0xd1] sm:$0xff] %v58
    %138 = vst [vmem:[#allocation4 + $0xe1] sm:$0xff] %v58
    %139 = vst [vmem:[#allocation4 + $0xf1] sm:$0xff] %v58
    %140 = vst [vmem:[#allocation4 + $0x9] sm:$0x7f] %v41
    %141 = vst [vmem:[#allocation4 + $0x19] sm:$0x7f] %v42
    %142 = vst [vmem:[#allocation4 + $0x29] sm:$0x7f] %v43
    %143 = vst [vmem:[#allocation4 + $0x39] sm:$0x7f] %v44
    %144 = vst [vmem:[#allocation4 + $0x49] sm:$0x7f] %v45
    %145 = vst [vmem:[#allocation4 + $0x59] sm:$0x7f] %v46
    %146 = vst [vmem:[#allocation4 + $0x69] sm:$0x7f] %v47
    %147 = vst [vmem:[#allocation4 + $0x79] sm:$0x7f] %v48
    %148 = vst [vmem:[#allocation4 + $0x89] sm:$0x7f] %v49
    %149 = vst [vmem:[#allocation4 + $0x99] sm:$0x7f] %v50
    %150 = vst [vmem:[#allocation4 + $0xa9] sm:$0x7f] %v51
    %151 = vst [vmem:[#allocation4 + $0xb9] sm:$0x7f] %v52
    %152 = vst [vmem:[#allocation4 + $0xc9] sm:$0x7f] %v53
    %153 = vst [vmem:[#allocation4 + $0xd9] sm:$0x7f] %v54
    %154 = vst [vmem:[#allocation4 + $0xe9] sm:$0x7f] %v55
    %155 = vst [vmem:[#allocation4 + $0xf9] sm:$0x7f] %v56
    %156 = vst [vmem:[#allocation6] sm:$0x1] %v25
    %157 = vst [vmem:[#allocation6 + $0x10] sm:$0x1] %v26
    %158 = vst [vmem:[#allocation6 + $0x20] sm:$0x1] %v27
    %159 = vst [vmem:[#allocation6 + $0x30] sm:$0x1] %v28
    %160 = vst [vmem:[#allocation6 + $0x40] sm:$0x1] %v29
    %161 = vst [vmem:[#allocation6 + $0x50] sm:$0x1] %v30
    %162 = vst [vmem:[#allocation6 + $0x60] sm:$0x1] %v31
    %163 = vst [vmem:[#allocation6 + $0x70] sm:$0x1] %v32
    %164 = vst [vmem:[#allocation6 + $0x80] sm:$0x1] %v33
    %165 = vst [vmem:[#allocation6 + $0x90] sm:$0x1] %v34
    %166 = vst [vmem:[#allocation6 + $0xa0] sm:$0x1] %v35
    %167 = vst [vmem:[#allocation6 + $0xb0] sm:$0x1] %v36
    %168 = vst [vmem:[#allocation6 + $0xc0] sm:$0x1] %v37
    %169 = vst [vmem:[#allocation6 + $0xd0] sm:$0x1] %v38
    %170 = vst [vmem:[#allocation6 + $0xe0] sm:$0x1] %v39
    %171 = vst [vmem:[#allocation6 + $0xf0] sm:$0x1] %v40
    %172 = vst [vmem:[#allocation6 + $0x1] sm:$0xff] %v59
    %173 = vst [vmem:[#allocation6 + $0x11] sm:$0xff] %v59
    %174 = vst [vmem:[#allocation6 + $0x21] sm:$0xff] %v59
    %175 = vst [vmem:[#allocation6 + $0x31] sm:$0xff] %v59
    %176 = vst [vmem:[#allocation6 + $0x41] sm:$0xff] %v59
    %177 = vst [vmem:[#allocation6 + $0x51] sm:$0xff] %v59
    %178 = vst [vmem:[#allocation6 + $0x61] sm:$0xff] %v59
    %179 = vst [vmem:[#allocation6 + $0x71] sm:$0xff] %v59
    %180 = vst [vmem:[#allocation6 + $0x81] sm:$0xff] %v59
    %181 = vst [vmem:[#allocation6 + $0x91] sm:$0xff] %v59
    %182 = vst [vmem:[#allocation6 + $0xa1] sm:$0xff] %v59
    %183 = vst [vmem:[#allocation6 + $0xb1] sm:$0xff] %v59
    %184 = vst [vmem:[#allocation6 + $0xc1] sm:$0xff] %v59
    %185 = vst [vmem:[#allocation6 + $0xd1] sm:$0xff] %v59
    %186 = vst [vmem:[#allocation6 + $0xe1] sm:$0xff] %v59
    %187 = vst [vmem:[#allocation6 + $0xf1] sm:$0xff] %v59
    %188 = vst [vmem:[#allocation6 + $0x9] sm:$0x7f] %v41
    %189 = vst [vmem:[#allocation6 + $0x19] sm:$0x7f] %v42
    %190 = vst [vmem:[#allocation6 + $0x29] sm:$0x7f] %v43
    %191 = vst [vmem:[#allocation6 + $0x39] sm:$0x7f] %v44
    %192 = vst [vmem:[#allocation6 + $0x49] sm:$0x7f] %v45
    %193 = vst [vmem:[#allocation6 + $0x59] sm:$0x7f] %v46
    %194 = vst [vmem:[#allocation6 + $0x69] sm:$0x7f] %v47
    %195 = vst [vmem:[#allocation6 + $0x79] sm:$0x7f] %v48
    %196 = vst [vmem:[#allocation6 + $0x89] sm:$0x7f] %v49
    %197 = vst [vmem:[#allocation6 + $0x99] sm:$0x7f] %v50
    %198 = vst [vmem:[#allocation6 + $0xa9] sm:$0x7f] %v51
    %199 = vst [vmem:[#allocation6 + $0xb9] sm:$0x7f] %v52
    %200 = vst [vmem:[#allocation6 + $0xc9] sm:$0x7f] %v53
    %201 = vst [vmem:[#allocation6 + $0xd9] sm:$0x7f] %v54
    %202 = vst [vmem:[#allocation6 + $0xe9] sm:$0x7f] %v55
    %203 = vst [vmem:[#allocation6 + $0xf9] sm:$0x7f] %v56
    // Predicated region
    $region22: #{tpu_custom_call.1} parent=1 // pred_check
      _
    $region23: #{tpu_custom_call.1} parent=1 // pred_check_branch
      %205 = sbr.rel (0) target = $region25
    $region24: #{tpu_custom_call.1} parent=1 // pred_region
      %s207 = ssub.s32 4096, 4096
      %208 = vsyncadd [#allocation3], %s207
      %s209 = sshll.u32 [#allocation2], 4
      %s210 = int_to_ptr.vmem [resolvable:$true] %s209
      %215 = dma.vmem_to_hbm [thread:$0]  %s210, 4096, %s5, [#allocation3], 128, 128, 8
    $region25: #{tpu_custom_call.1} parent=1 // pred_fallthru
      _
    // Predicated region
    $region26: #{tpu_custom_call.1} parent=1 // pred_check
      _
    $region27: #{tpu_custom_call.1} parent=1 // pred_check_branch
      %217 = sbr.rel (0) target = $region29
    $region28: #{tpu_custom_call.1} parent=1 // pred_region
      %s219 = ssub.s32 4096, 4096
      %220 = vsyncadd [#allocation5], %s219
      %s221 = sshll.u32 [#allocation4], 4
      %s222 = int_to_ptr.vmem [resolvable:$true] %s221
      %227 = dma.vmem_to_hbm [thread:$0]  %s222, 4096, %s6, [#allocation5], 128, 128, 8
    $region29: #{tpu_custom_call.1} parent=1 // pred_fallthru
      _
    // Predicated region
    $region30: #{tpu_custom_call.1} parent=1 // pred_check
      _
    $region31: #{tpu_custom_call.1} parent=1 // pred_check_branch
      %229 = sbr.rel (0) target = $region33
    $region32: #{tpu_custom_call.1} parent=1 // pred_region
      %s231 = ssub.s32 4096, 4096
      %232 = vsyncadd [#allocation5], %s231
      %s233 = sshll.u32 [#allocation6], 4
      %s234 = int_to_ptr.vmem [resolvable:$true] %s233
      %239 = dma.vmem_to_hbm [thread:$0]  %s234, 4096, %s7, [#allocation5], 128, 128, 8
    $region33: #{tpu_custom_call.1} parent=1 // pred_fallthru
      _
    // Predicated region
    $region34: #{tpu_custom_call.1} parent=1 // pred_check
      _
    $region35: #{tpu_custom_call.1} parent=1 // pred_check_branch
      %241 = sbr.rel (0) target = $region37
    $region36: #{tpu_custom_call.1} parent=1 // pred_region
      %242 = dma.done [#allocation3], 4096
    $region37: #{tpu_custom_call.1} parent=1 // pred_fallthru
      _
    // Predicated region
    $region38: #{tpu_custom_call.1} parent=1 // pred_check
      _
    $region39: #{tpu_custom_call.1} parent=1 // pred_check_branch
      %244 = sbr.rel (0) target = $region41
    $region40: #{tpu_custom_call.1} parent=1 // pred_region
      %245 = dma.done [#allocation5], 4096
    $region41: #{tpu_custom_call.1} parent=1 // pred_fallthru
      _
    // Predicated region
    $region42: #{tpu_custom_call.1} parent=1 // pred_check
      _
    $region43: #{tpu_custom_call.1} parent=1 // pred_check_branch
      %247 = sbr.rel (0) target = $region45
    $region44: #{tpu_custom_call.1} parent=1 // pred_region
      %248 = dma.done [#allocation5], 4096
    $region45: #{tpu_custom_call.1} parent=1 // pred_fallthru
      _
    %249 = vsyncpa [#allocation3], 1
    %250 = vsyncpa [#allocation5], 1

</llo_original>
